<compile_context>
chip_gen: v7x
topology: tpu7x:2x2x1
jax: 0.10.0
libtpu: 0.0.40
codegen_flags: <defaults>
</compile_context>

<pallas_src>
import jax
import jax.numpy as jnp
from jax.experimental import pallas as pl
from jax.experimental.pallas import tpu as pltpu

_EPS = 1e-5


def _conv_cp():
    return pltpu.CompilerParams(
        dimension_semantics=("parallel",),
        vmem_limit_bytes=32 * 1024 * 1024,
    )


def _pick_row_tile(m, prefer=(512, 256, 128, 64, 32, 16, 8)):
    """Largest row tile (multiple of 8) dividing m that still leaves >=2 blocks."""
    for t in prefer:
        if m % t == 0 and m // t >= 2:
            return t
    return m


# ---------------------------------------------------------------------------
# BN(eval) + ReLU, lane-dense elementwise kernel (produces bf16 conv operand)
# ---------------------------------------------------------------------------

def _bn_relu_kernel(x_ref, s_ref, t_ref, o_ref):
    o_ref[...] = jnp.maximum(x_ref[...] * s_ref[...] + t_ref[...], 0.0).astype(o_ref.dtype)


def bn_relu_bf16(x_nhwc, gamma, beta, mean, var, eps=_EPS):
    """relu(batchnorm_eval(x)) -> bf16, with rows folded into lanes when C<128."""
    n, h, w, c = x_nhwc.shape
    scale = gamma / jnp.sqrt(var + eps)
    shift = beta - mean * scale
    m = n * h * w

    fold = 1
    if c < 128 and 128 % c == 0 and m % (128 // c) == 0:
        fold = 128 // c
    mf, cf = m // fold, c * fold

    s2 = jnp.tile(scale, (fold,)).reshape(1, cf).astype(jnp.float32)
    t2 = jnp.tile(shift, (fold,)).reshape(1, cf).astype(jnp.float32)

    tm = _pick_row_tile(mf)
    out = pl.pallas_call(
        _bn_relu_kernel,
        out_shape=jax.ShapeDtypeStruct((mf, cf), jnp.bfloat16),
        grid=(mf // tm,),
        in_specs=[pl.BlockSpec((tm, cf), lambda i: (i, 0)),
                  pl.BlockSpec((1, cf), lambda i: (0, 0)),
                  pl.BlockSpec((1, cf), lambda i: (0, 0))],
        out_specs=pl.BlockSpec((tm, cf), lambda i: (i, 0)),
        compiler_params=pltpu.CompilerParams(dimension_semantics=("parallel",)),
    )(x_nhwc.reshape(mf, cf), s2, t2)
    return out.reshape(n, h, w, c)


# ---------------------------------------------------------------------------
# Fused 3x3 convolution kernels (9 shifted GEMMs accumulated in f32)
# ---------------------------------------------------------------------------

def _accumulate_taps(a_ref, w_ref, stride, hout, wout, cin):
    """Sum over the 9 taps of a 3x3 conv for one image -> (hout*wout, cout) f32.

    stride==1: a_ref block is (1, Hp, Wp, Cin) (padded image).
    stride==2: a_ref block is (1, 2, 2, Hq, Wq, Cin) phase layout, where the
               padded image was reshaped (Hp, Wp) -> (Hq, 2, Wq, 2) and the
               phase dims moved forward, so every tap is a contiguous slice.
    """
    acc = None
    for dy in range(3):
        for dx in range(3):
            if stride == 1:
                a = a_ref[0, dy:dy + hout, dx:dx + wout, :]
            else:
                a = a_ref[0, dy % 2, dx % 2,
                          dy // 2:dy // 2 + hout,
                          dx // 2:dx // 2 + wout, :]
            p = jnp.dot(a.reshape(hout * wout, cin), w_ref[dy * 3 + dx],
                        preferred_element_type=jnp.float32)
            acc = p if acc is None else acc + p
    return acc


def conv3x3_scale_shift_relu(a_bf16, w9_bf16, scale, shift):
    """relu(scale * conv3x3_s1(a) + shift); scale/shift fold bias + BN2 (eval)."""
    n, h, w, cin = a_bf16.shape
    cout = w9_bf16.shape[-1]
    hout, wout = h, w
    ap = jnp.pad(a_bf16, ((0, 0), (1, 1), (1, 1), (0, 0)))
    hp, wp = h + 2, w + 2

    def kernel(a_ref, w_ref, s_ref, t_ref, o_ref):
        acc = _accumulate_taps(a_ref, w_ref, 1, hout, wout, cin)
        y = jnp.maximum(acc * s_ref[...] + t_ref[...], 0.0)
        o_ref[...] = y.reshape(1, hout * wout, cout).astype(o_ref.dtype)

    out = pl.pallas_call(
        kernel,
        out_shape=jax.ShapeDtypeStruct((n, hout * wout, cout), jnp.bfloat16),
        grid=(n,),
        in_specs=[
            pl.BlockSpec((1, hp, wp, cin), lambda i: (i, 0, 0, 0)),
            pl.BlockSpec((9, cin, cout), lambda i: (0, 0, 0)),
            pl.BlockSpec((1, cout), lambda i: (0, 0)),
            pl.BlockSpec((1, cout), lambda i: (0, 0)),
        ],
        out_specs=pl.BlockSpec((1, hout * wout, cout), lambda i: (i, 0, 0)),
        compiler_params=_conv_cp(),
    )(ap, w9_bf16,
      scale.reshape(1, cout).astype(jnp.float32),
      shift.reshape(1, cout).astype(jnp.float32))
    return out.reshape(n, hout, wout, cout)


def conv3x3_bias_add_identity(a_bf16, w9_bf16, bias, residual_f32):
    """conv3x3_s1(a) + bias + residual  (identity shortcut), f32 output."""
    n, h, w, cin = a_bf16.shape
    cout = w9_bf16.shape[-1]
    hout, wout = h, w
    ap = jnp.pad(a_bf16, ((0, 0), (1, 1), (1, 1), (0, 0)))
    hp, wp = h + 2, w + 2
    res3 = residual_f32.reshape(n, hout * wout, cout).astype(jnp.float32)

    def kernel(a_ref, w_ref, b_ref, r_ref, o_ref):
        acc = _accumulate_taps(a_ref, w_ref, 1, hout, wout, cin)
        y = acc + b_ref[...] + r_ref[0]
        o_ref[...] = y.reshape(1, hout * wout, cout).astype(o_ref.dtype)

    out = pl.pallas_call(
        kernel,
        out_shape=jax.ShapeDtypeStruct((n, hout * wout, cout), jnp.float32),
        grid=(n,),
        in_specs=[
            pl.BlockSpec((1, hp, wp, cin), lambda i: (i, 0, 0, 0)),
            pl.BlockSpec((9, cin, cout), lambda i: (0, 0, 0)),
            pl.BlockSpec((1, cout), lambda i: (0, 0)),
            pl.BlockSpec((1, hout * wout, cout), lambda i: (i, 0, 0)),
        ],
        out_specs=pl.BlockSpec((1, hout * wout, cout), lambda i: (i, 0, 0)),
        compiler_params=_conv_cp(),
    )(ap, w9_bf16, bias.reshape(1, cout).astype(jnp.float32), res3)
    return out.reshape(n, hout, wout, cout)


def conv3x3_bias_add_projection(a_bf16, w9_bf16, bias, xs_bf16, wsc_bf16, bsc, stride):
    """conv3x3_stride(a) + bias + (1x1 shortcut conv of xs + bsc), f32 output."""
    n, h, w, cin = a_bf16.shape
    cout = w9_bf16.shape[-1]
    cin_sc = xs_bf16.shape[-1]
    if stride == 1:
        hout, wout = h, w
    else:
        assert stride == 2 and h % 2 == 0 and w % 2 == 0
        hout, wout = h // 2, w // 2

    ap = jnp.pad(a_bf16, ((0, 0), (1, 1), (1, 1), (0, 0)))
    hp, wp = h + 2, w + 2
    if stride == 2:
        hq, wq = hp // 2, wp // 2
        # (N, Hp, Wp, C) -> (N, 2, 2, Hq, Wq, C): one cheap relayout so every
        # tap becomes a contiguous static slice inside the kernel.
        a_in = ap.reshape(n, hq, 2, wq, 2, cin).transpose(0, 2, 4, 1, 3, 5)
        a_spec = pl.BlockSpec((1, 2, 2, hq, wq, cin),
                              lambda i: (i, 0, 0, 0, 0, 0))
    else:
        a_in = ap
        a_spec = pl.BlockSpec((1, hp, wp, cin), lambda i: (i, 0, 0, 0))

    xs3 = xs_bf16.reshape(n, hout * wout, cin_sc)

    def kernel(a_ref, w_ref, b_ref, xs_ref, wsc_ref, bsc_ref, o_ref):
        acc = _accumulate_taps(a_ref, w_ref, stride, hout, wout, cin)
        res = jnp.dot(xs_ref[0], wsc_ref[...],
                      preferred_element_type=jnp.float32) + bsc_ref[...]
        y = acc + b_ref[...] + res
        o_ref[...] = y.reshape(1, hout * wout, cout).astype(o_ref.dtype)

    out = pl.pallas_call(
        kernel,
        out_shape=jax.ShapeDtypeStruct((n, hout * wout, cout), jnp.float32),
        grid=(n,),
        in_specs=[
            a_spec,
            pl.BlockSpec((9, cin, cout), lambda i: (0, 0, 0)),
            pl.BlockSpec((1, cout), lambda i: (0, 0)),
            pl.BlockSpec((1, hout * wout, cin_sc), lambda i: (i, 0, 0)),
            pl.BlockSpec((cin_sc, cout), lambda i: (0, 0)),
            pl.BlockSpec((1, cout), lambda i: (0, 0)),
        ],
        out_specs=pl.BlockSpec((1, hout * wout, cout), lambda i: (i, 0, 0)),
        compiler_params=_conv_cp(),
    )(a_in, w9_bf16, bias.reshape(1, cout).astype(jnp.float32),
      xs3, wsc_bf16, bsc.reshape(1, cout).astype(jnp.float32))
    return out.reshape(n, hout, wout, cout)


# ---------------------------------------------------------------------------
# Parameter construction (deterministic, synthetic) + WideBasic forward
# ---------------------------------------------------------------------------

def _conv_init(key, kh, kw, cin, cout):
    k1, k2 = jax.random.split(key)
    bound = 1.0 / ((kh * kw * cin) ** 0.5)
    w = jax.random.uniform(k1, (kh, kw, cin, cout), jnp.float32, -bound, bound)
    b = jax.random.uniform(k2, (cout,), jnp.float32, -bound, bound)
    return {"w": w, "b": b}


def _bn_init(key, c):
    k1, k2, k3 = jax.random.split(key, 3)
    return {"gamma": 1.0 + 0.1 * jax.random.normal(k1, (c,), jnp.float32),
            "beta": 0.1 * jax.random.normal(k2, (c,), jnp.float32),
            "mean": 0.1 * jax.random.normal(k3, (c,), jnp.float32),
            "var": jnp.ones((c,), jnp.float32)}


def init_wide_basic(key, inplanes, outplanes, stride):
    idx = [0]

    def nk():
        k = jax.random.fold_in(key, idx[0])
        idx[0] += 1
        return k

    blk = {
        "bn1": _bn_init(nk(), inplanes),
        "conv1": _conv_init(nk(), 3, 3, inplanes, outplanes),
        "bn2": _bn_init(nk(), outplanes),
        "conv2": _conv_init(nk(), 3, 3, outplanes, outplanes),
        "stride": stride,
        "is_identity": (stride == 1 and inplanes == outplanes),
    }
    if not blk["is_identity"]:
        sc = _conv_init(nk(), 1, 1, inplanes, outplanes)
        blk["shortcut"] = {"w": sc["w"].reshape(inplanes, outplanes), "b": sc["b"]}
    return blk


def _w9(w_hwio):
    kh, kw, cin, cout = w_hwio.shape
    return w_hwio.reshape(kh * kw, cin, cout).astype(jnp.bfloat16)


def wide_basic_forward(blk, x_nchw):
    """WideBasic.forward, eval-mode BN / dropout; NCHW in, NCHW f32 out."""
    x = jnp.transpose(x_nchw, (0, 2, 3, 1)).astype(jnp.float32)   # NHWC

    # relu(bn1(x)) -> bf16 conv operand (lane-dense elementwise kernel).
    bn1 = blk["bn1"]
    a1 = bn_relu_bf16(x, bn1["gamma"], bn1["beta"], bn1["mean"], bn1["var"])

    # conv1 (3x3, s1, p1, bias) with bn2+relu fused into the GEMM epilogue:
    #   relu(s2*(conv + b1) + t2) == relu(s2*conv + (s2*b1 + t2))
    bn2 = blk["bn2"]
    s2 = bn2["gamma"] / jnp.sqrt(bn2["var"] + _EPS)
    t2 = bn2["beta"] - bn2["mean"] * s2
    eff_scale = s2
    eff_shift = s2 * blk["conv1"]["b"] + t2
    a2 = conv3x3_scale_shift_relu(a1, _w9(blk["conv1"]["w"]), eff_scale, eff_shift)

    # TODO(synk): train-mode dropout not implemented; eval-mode identity.

    # conv2 (3x3, stride s, p1, bias) with the residual add fused as epilogue.
    w2 = _w9(blk["conv2"]["w"])
    if blk["is_identity"]:
        out = conv3x3_bias_add_identity(a2, w2, blk["conv2"]["b"], x)
    else:
        s = blk["stride"]
        xs = x[:, ::s, ::s, :].astype(jnp.bfloat16)
        out = conv3x3_bias_add_projection(
            a2, w2, blk["conv2"]["b"],
            xs, blk["shortcut"]["w"].astype(jnp.bfloat16), blk["shortcut"]["b"],
            stride=s)
    return jnp.transpose(out, (0, 3, 1, 2))


# ---------------------------------------------------------------------------
# Plain-JAX reference (mirrors the bf16 operand / f32 accumulation policy)
# ---------------------------------------------------------------------------

def wide_basic_reference(blk, x_nchw, eps=_EPS):
    x = jnp.transpose(x_nchw, (0, 2, 3, 1)).astype(jnp.float32)

    def bn(v, p):
        sc = p["gamma"] / jnp.sqrt(p["var"] + eps)
        sh = p["beta"] - p["mean"] * sc
        return v * sc + sh

    def conv(a_bf16, w, b, stride):
        y = jax.lax.conv_general_dilated(
            a_bf16, w.astype(jnp.bfloat16),
            window_strides=(stride, stride), padding=((1, 1), (1, 1)),
            dimension_numbers=("NHWC", "HWIO", "NHWC"),
            preferred_element_type=jnp.float32)
        return y + b

    a1 = jnp.maximum(bn(x, blk["bn1"]), 0.0).astype(jnp.bfloat16)
    z1 = conv(a1, blk["conv1"]["w"], blk["conv1"]["b"], 1)
    a2 = jnp.maximum(bn(z1, blk["bn2"]), 0.0).astype(jnp.bfloat16)
    z2 = conv(a2, blk["conv2"]["w"], blk["conv2"]["b"], blk["stride"])
    if blk["is_identity"]:
        res = x
    else:
        s = blk["stride"]
        xs = x[:, ::s, ::s, :].astype(jnp.bfloat16)
        n, ho, wo, ci = xs.shape
        res = jnp.dot(xs.reshape(n * ho * wo, ci),
                      blk["shortcut"]["w"].astype(jnp.bfloat16),
                      preferred_element_type=jnp.float32
                      ).reshape(n, ho, wo, -1) + blk["shortcut"]["b"]
    return jnp.transpose(z2 + res, (0, 3, 1, 2))


if __name__ == "__main__":
    key = jax.random.PRNGKey(0)
    pkey, xkey = jax.random.split(key)

    N, C_IN, H, W = 2, 32, 16, 16
    x = jax.random.normal(xkey, (N, C_IN, H, W), jnp.float32)

    # Identity block (stride 1, inplanes == outplanes) and projection block
    # (stride 2, 1x1 shortcut) exercise both WideBasic branches.
    blk_id = init_wide_basic(jax.random.fold_in(pkey, 0), C_IN, C_IN, stride=1)
    blk_pr = init_wide_basic(jax.random.fold_in(pkey, 1), C_IN, 2 * C_IN, stride=2)

    out_id = wide_basic_forward(blk_id, x)
    out_pr = wide_basic_forward(blk_pr, x)
    jax.block_until_ready((out_id, out_pr))

    assert out_id.shape == (N, C_IN, H, W)
    assert out_pr.shape == (N, 2 * C_IN, H // 2, W // 2)
    assert bool(jnp.all(jnp.isfinite(out_id)))
    assert bool(jnp.all(jnp.isfinite(out_pr)))

    ref_id = wide_basic_reference(blk_id, x)
    ref_pr = wide_basic_reference(blk_pr, x)
    assert bool(jnp.allclose(out_id, ref_id, rtol=5e-2, atol=5e-2))
    assert bool(jnp.allclose(out_pr, ref_pr, rtol=5e-2, atol=5e-2))

    print("KERNEL_OK")
</pallas_src>

<mosaic_0001>
module attributes {stable_mosaic.version = 11 : i64} {
  func.func @_bn_relu_kernel(%arg0: i32, %arg1: memref<64x128xf32, #tpu.memory_space<vmem>>, %arg2: memref<1x128xf32, #tpu.memory_space<vmem>>, %arg3: memref<1x128xf32, #tpu.memory_space<vmem>>, %arg4: memref<64x128xbf16, #tpu.memory_space<vmem>>) attributes {dimension_semantics = [#tpu.dimension_semantics<parallel>], iteration_bounds = array<i64: 2>, scalar_prefetch = 0 : i64, scratch_operands = 0 : i64, tpu.core_type = #tpu.core_type<tc>, window_params = [{transform_indices = @transform_0, window_bounds = array<i64: 64, 128>}, {pipeline_mode = #tpu.pipeline_mode<synchronous>, transform_indices = @transform_1, window_bounds = array<i64: 1, 128>}, {pipeline_mode = #tpu.pipeline_mode<synchronous>, transform_indices = @transform_2, window_bounds = array<i64: 1, 128>}, {transform_indices = @transform_3, window_bounds = array<i64: 64, 128>}]} {
    %c0 = arith.constant 0 : index
    %c0_0 = arith.constant 0 : index
    %0 = vector.load %arg1[%c0, %c0_0] : memref<64x128xf32, #tpu.memory_space<vmem>>, vector<64x128xf32>
    %c0_1 = arith.constant 0 : index
    %c0_2 = arith.constant 0 : index
    %1 = vector.load %arg2[%c0_1, %c0_2] : memref<1x128xf32, #tpu.memory_space<vmem>>, vector<1x128xf32>
    %2 = vector.broadcast %1 : vector<1x128xf32> to vector<64x128xf32>
    %3 = arith.mulf %0, %2 : vector<64x128xf32>
    %c0_3 = arith.constant 0 : index
    %c0_4 = arith.constant 0 : index
    %4 = vector.load %arg3[%c0_3, %c0_4] : memref<1x128xf32, #tpu.memory_space<vmem>>, vector<1x128xf32>
    %5 = vector.broadcast %4 : vector<1x128xf32> to vector<64x128xf32>
    %6 = arith.addf %3, %5 : vector<64x128xf32>
    %cst = arith.constant 0.000000e+00 : f32
    %7 = vector.broadcast %cst : f32 to vector<64x128xf32>
    %8 = arith.maximumf %6, %7 : vector<64x128xf32>
    %9 = arith.truncf %8 : vector<64x128xf32> to vector<64x128xbf16>
    %c0_5 = arith.constant 0 : index
    %c0_6 = arith.constant 0 : index
    %10 = vector.load %arg4[%c0_5, %c0_6] : memref<64x128xbf16, #tpu.memory_space<vmem>>, vector<64x128xbf16>
    tpu.vector_store %arg4[%c0_5, %c0_6], %9 {strides = array<i32>} : memref<64x128xbf16, #tpu.memory_space<vmem>>, vector<64x128xbf16>,
    return
  }
  func.func @transform_0(%arg0: i32) -> (i32, i32) {
    %c0_i32 = arith.constant 0 : i32
    %c0_i32_0 = arith.constant 0 : i32
    return %arg0, %c0_i32 : i32, i32
  }
  func.func @transform_1(%arg0: i32) -> (i32, i32) {
    %c0_i32 = arith.constant 0 : i32
    %c0_i32_0 = arith.constant 0 : i32
    %c0_i32_1 = arith.constant 0 : i32
    return %c0_i32, %c0_i32_0 : i32, i32
  }
  func.func @transform_2(%arg0: i32) -> (i32, i32) {
    %c0_i32 = arith.constant 0 : i32
    %c0_i32_0 = arith.constant 0 : i32
    %c0_i32_1 = arith.constant 0 : i32
    return %c0_i32, %c0_i32_0 : i32, i32
  }
  func.func @transform_3(%arg0: i32) -> (i32, i32) {
    %c0_i32 = arith.constant 0 : i32
    %c0_i32_0 = arith.constant 0 : i32
    return %arg0, %c0_i32 : i32, i32
  }
}

</mosaic_0001>

<llo_original>
// kernel: tpu_custom_call.1
$region0: #{tpu_custom_call.1}
  #allocation0 [shape = 'u32[]', space=smem, size = 0x4, offset = 0x4, fixed_abs, tag = 'smem constant byte address 0x4 - core index']
  #allocation1 [shape = 'u32[144,128]{1,0:T(1,128)}', space=vmem, size = 0x12000, scoped, tag = 'internal scratch']
  %s0 = inlined_call_operand.hbm [shape: f32[128,128], index: 0, kind: input, shape index: {}]
  %s1 = inlined_call_operand.vmem [shape: f32[1,128], index: 1, kind: input, shape index: {}]
  %s2 = inlined_call_operand.vmem [shape: f32[1,128], index: 2, kind: input, shape index: {}]
  %s3 = inlined_call_operand.hbm [shape: bf16[128,128], index: 3, kind: output, shape index: {}]
  %s4 = sld [smem:[#allocation0]]
  $region49: #{tpu_custom_call.1} parent=0
    _
  %s6 = ssub.s32 1, %s4
  %s7 = scalar_select 0, %s6, %s4
  $region1: #{tpu_custom_call.1} parent=0
    #allocation2 [shape = 'u8[65536]{0}', space=vmem, size = 0x10000, scoped, tag = 'input window, operand 0']
    #allocation3 [shape = 's32[2]{0}', space=sflag, size = 0x8, scoped, tag = 'scoped memory for tpu_custom_call.1']
    #allocation4 [shape = 's32[2]{0}', space=sflag, size = 0x8, scoped, tag = 'scoped memory for tpu_custom_call.1']
    #allocation5 [shape = 'u8[32768]{0}', space=vmem, size = 0x8000, scoped, tag = 'output window, operand 0']
    %8 = vsyncpa [#allocation3], 0
    %s9 = scalar_lea.sflag [#allocation3], 1
    %10 = vsyncpa %s9, 0
    %11 = vsyncpa [#allocation4], 0
    %s12 = scalar_lea.sflag [#allocation4], 1
    %13 = vsyncpa %s12, 0
    loop: start=0, step=1, limit=4
    $region2: #{tpu_custom_call.1} parent=1 // loop_pre_header
      _
    $region3: #{tpu_custom_call.1} parent=1 // loop_header
      %s15 = sphi 0, %s19
      %p16 = scmp.ge.s32.totalorder %s15, 4
      %s25 = sphi 0, %s27
      %s28 = sphi 0, %s25
      %s29 = sphi 0, %s28
      %s45 = sphi 0, %s29
      %s49 = sphi 0, %s49
      %s51 = sphi 0, %s49
      %s52 = sphi 0, %s51
      %s66 = sphi 0, %s52
      %s70 = sphi 0, %s70
      %s72 = sphi 0, %s70
      %s73 = sphi 0, %s72
      %s87 = sphi 0, %s73
      %s93 = sphi 0, %s95
      %s96 = sphi 0, %s93
      %s97 = sphi 0, %s96
      %s113 = sphi 0, %s97
    $region4: #{tpu_custom_call.1} parent=1 // loop_header_branch
      %18 = sbr.rel (%p16) target = $region8
    $region5: #{tpu_custom_call.1} parent=1 // loop_body
      %s20 = ssub.s32 %s15, 1
      %s21 = ssub.s32 %s15, 2
      %s22 = sadd.s32 %s15, 1
      %s23 = ssub.s32 %s15, %s22
      %p24 = scmp.eq.s32.totalorder %s23, 0
      %s26 = sadd.s32 %s25, 1
      %s27 = scalar_select %p24, %s25, %s26
      %p30 = pneg %p24
      %p31 = scmp.eq.s32.totalorder %s15, 1
      %p32 = por %p30, %p31
      %p33 = scmp.ne.s32.totalorder %s25, %s28
      %p34 = scmp.eq.s32.totalorder %s15, 0
      %p35 = por %p33, %p34
      %p36 = scmp.ne.s32.totalorder %s25, %s28
      %p37 = scmp.eq.s32.totalorder %s20, 1
      %p38 = por %p36, %p37
      %p39 = scmp.ne.s32.totalorder %s28, %s29
      %p40 = scmp.eq.s32.totalorder %s20, 0
      %p41 = por %p39, %p40
      %p42 = scmp.ne.s32.totalorder %s28, %s29
      %p43 = scmp.eq.s32.totalorder %s21, 1
      %p44 = por %p42, %p43
      %p46 = scmp.ne.s32.totalorder %s29, %s45
      %p47 = scmp.eq.s32.totalorder %s21, 0
      %p48 = por %p46, %p47
      %s50 = sadd.s32 %s49, 1
      %p53 = scmp.eq.s32.totalorder %s15, 1
      %p54 = scmp.ne.s32.totalorder %s49, %s51
      %p55 = scmp.eq.s32.totalorder %s15, 0
      %p56 = por %p54, %p55
      %p57 = scmp.ne.s32.totalorder %s49, %s51
      %p58 = scmp.eq.s32.totalorder %s20, 1
      %p59 = por %p57, %p58
      %p60 = scmp.ne.s32.totalorder %s51, %s52
      %p61 = scmp.eq.s32.totalorder %s20, 0
      %p62 = por %p60, %p61
      %p63 = scmp.ne.s32.totalorder %s51, %s52
      %p64 = scmp.eq.s32.totalorder %s21, 1
      %p65 = por %p63, %p64
      %p67 = scmp.ne.s32.totalorder %s52, %s66
      %p68 = scmp.eq.s32.totalorder %s21, 0
      %p69 = por %p67, %p68
      %s71 = sadd.s32 %s70, 1
      %p74 = scmp.eq.s32.totalorder %s15, 1
      %p75 = scmp.ne.s32.totalorder %s70, %s72
      %p76 = scmp.eq.s32.totalorder %s15, 0
      %p77 = por %p75, %p76
      %p78 = scmp.ne.s32.totalorder %s70, %s72
      %p79 = scmp.eq.s32.totalorder %s20, 1
      %p80 = por %p78, %p79
      %p81 = scmp.ne.s32.totalorder %s72, %s73
      %p82 = scmp.eq.s32.totalorder %s20, 0
      %p83 = por %p81, %p82
      %p84 = scmp.ne.s32.totalorder %s72, %s73
      %p85 = scmp.eq.s32.totalorder %s21, 1
      %p86 = por %p84, %p85
      %p88 = scmp.ne.s32.totalorder %s73, %s87
      %p89 = scmp.eq.s32.totalorder %s21, 0
      %p90 = por %p88, %p89
      %s91 = ssub.s32 %s15, %s22
      %p92 = scmp.eq.s32.totalorder %s91, 0
      %s94 = sadd.s32 %s93, 1
      %s95 = scalar_select %p92, %s93, %s94
      %p98 = pneg %p92
      %p99 = scmp.eq.s32.totalorder %s15, 1
      %p100 = por %p98, %p99
      %p101 = scmp.ne.s32.totalorder %s93, %s96
      %p102 = scmp.eq.s32.totalorder %s15, 0
      %p103 = por %p101, %p102
      %p104 = scmp.ne.s32.totalorder %s93, %s96
      %p105 = scmp.eq.s32.totalorder %s20, 1
      %p106 = por %p104, %p105
      %p107 = scmp.ne.s32.totalorder %s96, %s97
      %p108 = scmp.eq.s32.totalorder %s20, 0
      %p109 = por %p107, %p108
      %p110 = scmp.ne.s32.totalorder %s96, %s97
      %p111 = scmp.eq.s32.totalorder %s21, 1
      %p112 = por %p110, %p111
      %p114 = scmp.ne.s32.totalorder %s97, %s113
      %p115 = scmp.eq.s32.totalorder %s21, 0
      %p116 = por %p114, %p115
      %p117 = scmp.le.s32.totalorder 1, %s15
      %p118 = scmp.lt.s32.totalorder %s15, 3
      %p119 = pnand %p117, %p118
      %p120 = pneg %p119
      // Predicated region
      $region9: #{tpu_custom_call.1} parent=5 // pred_check
        _
      $region10: #{tpu_custom_call.1} parent=5 // pred_check_branch
        %122 = sbr.rel (%p119) target = $region12
      $region11: #{tpu_custom_call.1} parent=5 // pred_region
        %s123 = ssub.s32 %s15, 1
        // Predicated region
        $region13: #{tpu_custom_call.1} parent=11 // pred_check
          %p124 = pneg %p62
        $region14: #{tpu_custom_call.1} parent=11 // pred_check_branch
          %126 = sbr.rel (%p124) target = $region16
        $region15: #{tpu_custom_call.1} parent=11 // pred_region
          _
        $region16: #{tpu_custom_call.1} parent=11 // pred_fallthru
          _
        // Predicated region
        $region17: #{tpu_custom_call.1} parent=11 // pred_check
          %p127 = pneg %p83
        $region18: #{tpu_custom_call.1} parent=11 // pred_check_branch
          %129 = sbr.rel (%p127) target = $region20
        $region19: #{tpu_custom_call.1} parent=11 // pred_region
          _
        $region20: #{tpu_custom_call.1} parent=11 // pred_fallthru
          _
      $region12: #{tpu_custom_call.1} parent=5 // pred_fallthru
        _
      %p130 = scmp.lt.s32.totalorder %s15, 2
      // Predicated region
      $region21: #{tpu_custom_call.1} parent=5 // pred_check
        %p131 = pneg %p130
      $region22: #{tpu_custom_call.1} parent=5 // pred_check_branch
        %133 = sbr.rel (%p131) target = $region24
      $region23: #{tpu_custom_call.1} parent=5 // pred_region
        // Predicated region
        $region25: #{tpu_custom_call.1} parent=23 // pred_check
          %p134 = pneg %p35
        $region26: #{tpu_custom_call.1} parent=23 // pred_check_branch
          %136 = sbr.rel (%p134) target = $region28
        $region27: #{tpu_custom_call.1} parent=23 // pred_region
          %s137 = sand.u32 %s25, 1
          %s138 = scalar_lea.sflag [#allocation3], %s137
          %s139 = sand.u32 %s25, 1
          %s140 = smul.addr %s139, 64
          %s141 = scalar_lea.vmem [#allocation2], %s140
          %s142 = smul.u32 8, %s15
          %s144 = ssub.s32 1024, 1024
          %145 = vsyncadd %s138, %s144
          %s146 = smul.addr %s142, 128
          %s147 = scalar_lea.hbm %s0, %s146
          %s148 = sshll.u32 %s141, 4
          %s149 = int_to_ptr.vmem [resolvable:$true] %s148
          %154 = dma.hbm_to_vmem [thread:$0]  %s147, 1024, %s149, %s138, 128, 128, 8
        $region28: #{tpu_custom_call.1} parent=23 // pred_fallthru
          _
      $region24: #{tpu_custom_call.1} parent=5 // pred_fallthru
        _
      %p155 = scmp.le.s32.totalorder 1, %s15
      %p156 = scmp.lt.s32.totalorder %s15, 3
      %p157 = pnand %p155, %p156
      %p158 = pneg %p157
      // Predicated region
      $region29: #{tpu_custom_call.1} parent=5 // pred_check
        _
      $region30: #{tpu_custom_call.1} parent=5 // pred_check_branch
        %160 = sbr.rel (%p157) target = $region32
      $region31: #{tpu_custom_call.1} parent=5 // pred_region
        %s161 = ssub.s32 %s15, 1
        %s162 = sand.u32 %s28, 1
        %s163 = scalar_lea.sflag [#allocation3], %s162
        %s164 = sand.u32 %s28, 1
        %s165 = smul.addr %s164, 64
        %s166 = scalar_lea.vmem [#allocation2], %s165
        // Predicated region
        $region33: #{tpu_custom_call.1} parent=31 // pred_check
          %p167 = pneg %p41
        $region34: #{tpu_custom_call.1} parent=31 // pred_check_branch
          %169 = sbr.rel (%p167) target = $region36
        $region35: #{tpu_custom_call.1} parent=31 // pred_region
          %170 = dma.done %s163, 1024
        $region36: #{tpu_custom_call.1} parent=31 // pred_fallthru
          _
        %s171 = sand.u32 %s28, 1
        %s172 = scalar_lea.sflag [#allocation3], %s171
        %s173 = sand.u32 %s28, 1
        %s174 = smul.addr %s173, 64
        %s175 = scalar_lea.vmem [#allocation2], %s174
        %p176 = pneg %p41
        %p177 = pneg %p38
        %p178 = pneg %p62
        %p179 = pneg %p59
        %p180 = pneg %p83
        %p181 = pneg %p80
        %p182 = pneg %p109
        %p183 = pneg %p106
        %s184 = sand.u32 %s96, 1
        %s185 = scalar_lea.sflag [#allocation4], %s184
        %s186 = sand.u32 %s96, 1
        %s187 = smul.addr %s186, 32
        %s188 = scalar_lea.vmem [#allocation5], %s187
        %s189 = smul.u32 8, %s20
        %s190 = smul.u32 8, %s20
        %v191 = vld [vmem:[%s166] sm:$0xff]
        %v192 = vld [vmem:[%s166 + $0x8] sm:$0xff]
        %v193 = vld [vmem:[%s166 + $0x10] sm:$0xff]
        %v194 = vld [vmem:[%s166 + $0x18] sm:$0xff]
        %v195 = vld [vmem:[%s166 + $0x20] sm:$0xff]
        %v196 = vld [vmem:[%s166 + $0x28] sm:$0xff]
        %v197 = vld [vmem:[%s166 + $0x30] sm:$0xff]
        %v198 = vld [vmem:[%s166 + $0x38] sm:$0xff]
        %v199 = vld [vmem:[%s1] sm:$0x1]
        %v201 = vlaneseq
        %v202 = vshrl.u32 %v201, 7
        %v203 = vsub.s32 0, %v202
        %v204 = vrot.slane %v199, %v203
        %v206 = vmul.f32 %v191, %v204
        %v207 = vmul.f32 %v192, %v204
        %v208 = vmul.f32 %v193, %v204
        %v209 = vmul.f32 %v194, %v204
        %v210 = vmul.f32 %v195, %v204
        %v211 = vmul.f32 %v196, %v204
        %v212 = vmul.f32 %v197, %v204
        %v213 = vmul.f32 %v198, %v204
        %v214 = vld [vmem:[%s2] sm:$0x1]
        %v216 = vlaneseq
        %v217 = vshrl.u32 %v216, 7
        %v218 = vsub.s32 0, %v217
        %v219 = vrot.slane %v214, %v218
        %v221 = vadd.f32 %v206, %v219
        %v222 = vadd.f32 %v207, %v219
        %v223 = vadd.f32 %v208, %v219
        %v224 = vadd.f32 %v209, %v219
        %v225 = vadd.f32 %v210, %v219
        %v226 = vadd.f32 %v211, %v219
        %v227 = vadd.f32 %v212, %v219
        %v228 = vadd.f32 %v213, %v219
        %v229 = vmax.f32 %v221, 0.0
        %v230 = vmax.f32 %v222, 0.0
        %v231 = vmax.f32 %v223, 0.0
        %v232 = vmax.f32 %v224, 0.0
        %v233 = vmax.f32 %v225, 0.0
        %v234 = vmax.f32 %v226, 0.0
        %v235 = vmax.f32 %v227, 0.0
        %v236 = vmax.f32 %v228, 0.0
        %v237 = vpack.c.bf16 %v230, %v229
        %v238 = vpack.c.bf16 %v232, %v231
        %v239 = vpack.c.bf16 %v234, %v233
        %v240 = vpack.c.bf16 %v236, %v235
        %v245 = vunpack.c.l.b16 %v237
        %v246 = vunpack.c.h.b16 %v237
        %v247 = vunpack.c.l.b16 %v238
        %v248 = vunpack.c.h.b16 %v238
        %v249 = vunpack.c.l.b16 %v239
        %v250 = vunpack.c.h.b16 %v239
        %v251 = vunpack.c.l.b16 %v240
        %v252 = vunpack.c.h.b16 %v240
        %v253 = vpack.c.b16 %v245, %v245
        %v254 = vpack.c.b16 %v246, %v246
        %v255 = vpack.c.b16 %v247, %v247
        %v256 = vpack.c.b16 %v248, %v248
        %v257 = vpack.c.b16 %v249, %v249
        %v258 = vpack.c.b16 %v250, %v250
        %v259 = vpack.c.b16 %v251, %v251
        %v260 = vpack.c.b16 %v252, %v252
        %269 = vst [vmem:[%s188] sm:$0xf] %v253
        %270 = vst [vmem:[%s188 + $0x4] sm:$0xf] %v254
        %271 = vst [vmem:[%s188 + $0x8] sm:$0xf] %v255
        %272 = vst [vmem:[%s188 + $0xc] sm:$0xf] %v256
        %273 = vst [vmem:[%s188 + $0x10] sm:$0xf] %v257
        %274 = vst [vmem:[%s188 + $0x14] sm:$0xf] %v258
        %275 = vst [vmem:[%s188 + $0x18] sm:$0xf] %v259
        %276 = vst [vmem:[%s188 + $0x1c] sm:$0xf] %v260
        %s277 = sand.u32 %s96, 1
        %s278 = scalar_lea.sflag [#allocation4], %s277
        %s279 = sand.u32 %s96, 1
        %s280 = smul.addr %s279, 32
        %s281 = scalar_lea.vmem [#allocation5], %s280
        // Predicated region
        $region37: #{tpu_custom_call.1} parent=31 // pred_check
          %p282 = pneg %p106
        $region38: #{tpu_custom_call.1} parent=31 // pred_check_branch
          %284 = sbr.rel (%p282) target = $region40
        $region39: #{tpu_custom_call.1} parent=31 // pred_region
          %s285 = smul.u32 8, %s20
          %s287 = ssub.s32 512, 512
          %288 = vsyncadd %s278, %s287
          %s289 = smul.addr %s285, 64
          %s290 = scalar_lea.hbm %s3, %s289
          %s291 = sshll.u32 %s281, 4
          %s292 = int_to_ptr.vmem [resolvable:$true] %s291
          %297 = dma.vmem_to_hbm [thread:$0]  %s292, 512, %s290, %s278, 64, 64, 4
        $region40: #{tpu_custom_call.1} parent=31 // pred_fallthru
          _
      $region32: #{tpu_custom_call.1} parent=5 // pred_fallthru
        _
      %p298 = scmp.le.s32.totalorder 2, %s15
      // Predicated region
      $region41: #{tpu_custom_call.1} parent=5 // pred_check
        %p299 = pneg %p298
      $region42: #{tpu_custom_call.1} parent=5 // pred_check_branch
        %301 = sbr.rel (%p299) target = $region44
      $region43: #{tpu_custom_call.1} parent=5 // pred_region
        %s302 = ssub.s32 %s15, 2
        // Predicated region
        $region45: #{tpu_custom_call.1} parent=43 // pred_check
          %p303 = pneg %p112
        $region46: #{tpu_custom_call.1} parent=43 // pred_check_branch
          %305 = sbr.rel (%p303) target = $region48
        $region47: #{tpu_custom_call.1} parent=43 // pred_region
          %s306 = sand.u32 %s97, 1
          %s307 = scalar_lea.sflag [#allocation4], %s306
          %s308 = sand.u32 %s97, 1
          %s309 = smul.addr %s308, 32
          %s310 = scalar_lea.vmem [#allocation5], %s309
          %311 = dma.done %s307, 512
        $region48: #{tpu_custom_call.1} parent=43 // pred_fallthru
          _
      $region44: #{tpu_custom_call.1} parent=5 // pred_fallthru
        _
    $region6: #{tpu_custom_call.1} parent=1 // loop_footer
      %s19 = sadd.s32 1, %s15
    $region7: #{tpu_custom_call.1} parent=1 // loop_footer_branch
      %14 = sbr.rel target = $region3
    $region8: #{tpu_custom_call.1} parent=1 // loop_exit
      _
    %312 = vsyncpa [#allocation3], 1
    %s313 = scalar_lea.sflag [#allocation3], 1
    %314 = vsyncpa %s313, 1
    %315 = vsyncpa [#allocation4], 1
    %s316 = scalar_lea.sflag [#allocation4], 1
    %317 = vsyncpa %s316, 1

</llo_original>
